<compile_context>
chip_gen: v7x
topology: tpu7x:2x2x1
jax: 0.10.0
libtpu: 0.0.40
codegen_flags: <defaults>
</compile_context>

<pallas_src>
import jax
import jax.numpy as jnp
from jax.experimental import pallas as pl
from jax.experimental.pallas import tpu as pltpu

PADDING_IDX = 0


def _rup(x, m):
    return ((x + m - 1) // m) * m


# ---------------------------------------------------------------------------
# Kernel: out[b, t] = sum_d u[b, d, t] * e[b, d, t] + bias[b, t]
# u and e both arrive in (Bt, D, T) layout (T on lanes), so the body is a
# pure VPU multiply + cross-sublane reduce; no transpose, no MXU.
# ---------------------------------------------------------------------------
def _pred_kernel(u_ref, e_ref, b_ref, out_ref):
    u = u_ref[...].astype(jnp.float32)
    e = e_ref[...].astype(jnp.float32)
    dot = jnp.sum(u * e, axis=1)                       # reduce over D -> (Bt, T)
    out_ref[...] = dot + b_ref[...].astype(jnp.float32)


def _vmem_capacity_bytes():
    """Physical per-core VMEM; conservative (v7x) fallback if the query fails."""
    try:
        info = pltpu.get_tpu_info()
        for name in ("vmem_capacity_bytes", "vmem_bytes", "vmem_size_bytes"):
            v = getattr(info, name, None)
            if v:
                return int(v)
    except Exception:
        pass
    return 64 * 1024 * 1024


def _tile_vmem_bytes(bt, D, T, u_itemsize, e_itemsize):
    """Lane/sublane-padded VMEM footprint of one grid step: double-buffered IO
    tiles plus the widened f32 product intermediate."""
    t_pad = _rup(T, 128)

    def slab(itemsize):
        sub = 8 * (4 // itemsize)                      # f32 -> 8 sublanes, bf16 -> 16
        return bt * _rup(D, sub) * t_pad * itemsize

    io = 2 * (slab(u_itemsize) + slab(e_itemsize)      # u, e   (double-buffered)
              + 2 * _rup(bt, 8) * t_pad * 4)           # bias + out (f32)
    inter = 2 * bt * _rup(D, 8) * t_pad * 4            # widened copies / product
    return io + inter


def lstm_net_forward(user_representations, targets, item_emb, item_bias,
                     *, block_batch=None, vmem_budget_bytes=None,
                     gather_dtype=None):
    """LSTMNet.forward.

    user_representations: (B, D, T) float (PyTorch layout), any float dtype
    targets:              (B, T) int32
    item_emb:             (num_items, D) float32
    item_bias:            (num_items, 1) float32
    gather_dtype:         optional dtype for the HBM-resident gathered
                          embeddings (e.g. jnp.bfloat16)
    returns               (B, T) float32
    """
    B, D, T = user_representations.shape
    assert targets.shape == (B, T)

    # Data-dependent gathers stay in XLA glue (rows are tiny, D=32), but the
    # transpose is fused into the gather so the kernel sees a lane-dense
    # (B, D, T) embedding tile -- no in-kernel transpose, no masked-lane e vregs.
    e = jnp.swapaxes(item_emb[targets], 1, 2)          # (B, D, T)
    if gather_dtype is not None:
        e = e.astype(gather_dtype)
    bias = item_bias[targets, 0].astype(jnp.float32)   # (B, T)

    u = user_representations
    u_isz = jnp.dtype(u.dtype).itemsize
    e_isz = jnp.dtype(e.dtype).itemsize

    # ---- generation-aware tile sizing -------------------------------------
    cap = _vmem_capacity_bytes()
    small_vmem = cap <= 96 * 1024 * 1024               # v7x-class: 64 MiB / TC, 2 TCs
    if vmem_budget_bytes is None:
        vmem_budget_bytes = int(cap * (0.40 if small_vmem else 0.50))

    if block_batch is None:
        per8 = _tile_vmem_bytes(8, D, T, u_isz, e_isz)
        bt = int(vmem_budget_bytes * 8 // max(per8, 1))
        bt = max(8, (bt // 8) * 8)
        if small_vmem and B >= 16:
            # v7x only: keep >= 2 grid steps so both TensorCores get work.
            bt = min(bt, _rup(pl.cdiv(B, 2), 8))
        if bt >= B:
            bt = B                                      # single full-batch block
    else:
        bt = min(block_batch, B)
    assert bt == B or bt % 8 == 0, "batch tile must be the full batch or a multiple of 8"

    # Ragged last block is fine: OOB rows are garbage on read, dropped on
    # write, and there is no reduction across the batch axis.
    grid = (pl.cdiv(B, bt),)

    footprint = _tile_vmem_bytes(bt, D, T, u_isz, e_isz)
    cap_frac = 0.60 if small_vmem else 0.75
    vmem_limit = min(int(cap * cap_frac), max(32 * 1024 * 1024, 2 * footprint))
    vmem_limit = max(vmem_limit, footprint + 4 * 1024 * 1024)

    cost = pl.CostEstimate(
        flops=2 * B * T * D + B * T,
        transcendentals=0,
        bytes_accessed=int(u.size * u_isz + e.size * e_isz
                           + bias.size * 4 + targets.size * 4 + B * T * 4),
    )

    out = pl.pallas_call(
        _pred_kernel,
        out_shape=jax.ShapeDtypeStruct((B, T), jnp.float32),
        grid_spec=pl.GridSpec(
            grid=grid,
            in_specs=[
                pl.BlockSpec((bt, D, T), lambda i: (i, 0, 0)),   # u   (B, D, T)
                pl.BlockSpec((bt, D, T), lambda i: (i, 0, 0)),   # e   (B, D, T)
                pl.BlockSpec((bt, T), lambda i: (i, 0)),         # bias
            ],
            out_specs=pl.BlockSpec((bt, T), lambda i: (i, 0)),
        ),
        compiler_params=pltpu.CompilerParams(
            dimension_semantics=("parallel",),
            vmem_limit_bytes=int(vmem_limit),
        ),
        cost_estimate=cost,
    )(u, e, bias)
    return out


def init_params(key, num_items, embedding_dim):
    """Deterministic parameter init matching ScaledEmbedding / ZeroEmbedding."""
    k_emb, _ = jax.random.split(key)
    item_emb = jax.random.normal(k_emb, (num_items, embedding_dim),
                                 dtype=jnp.float32) * (1.0 / embedding_dim)
    item_emb = item_emb.at[PADDING_IDX].set(0.0)
    item_bias = jnp.zeros((num_items, 1), dtype=jnp.float32)
    return item_emb, item_bias


def _reference(user_reps, targets, item_emb, item_bias):
    e_ref = item_emb[targets]                           # (B, T, D)
    b_ref = item_bias[targets, 0]                       # (B, T)
    return jnp.sum(jnp.transpose(user_reps, (0, 2, 1)) * e_ref, axis=-1) + b_ref


if __name__ == "__main__":
    NUM_ITEMS = 50
    key = jax.random.PRNGKey(0)
    (k_params, k_user, k_tgt, k_user2, k_tgt2, k_user3, k_tgt3) = jax.random.split(key, 7)

    # --- case 1: tiny shapes from the module spec (B=2, T=8, D=32) ---
    B, T, D = 2, 8, 32
    item_emb, item_bias = init_params(k_params, NUM_ITEMS, D)
    user_reps = jax.random.normal(k_user, (B, D, T), dtype=jnp.float32)
    targets = jax.random.randint(k_tgt, (B, T), 0, NUM_ITEMS, dtype=jnp.int32)

    out = jax.block_until_ready(lstm_net_forward(user_reps, targets, item_emb, item_bias))
    ref = _reference(user_reps, targets, item_emb, item_bias)
    assert out.shape == (B, T)
    assert jnp.allclose(out, ref, atol=1e-5, rtol=1e-5)

    # --- case 2: lane-dense T, larger batch (B=16, T=128) ---
    B2, T2 = 16, 128
    user_reps2 = jax.random.normal(k_user2, (B2, D, T2), dtype=jnp.float32)
    targets2 = jax.random.randint(k_tgt2, (B2, T2), 0, NUM_ITEMS, dtype=jnp.int32)
    out2 = jax.block_until_ready(lstm_net_forward(user_reps2, targets2, item_emb, item_bias))
    ref2 = _reference(user_reps2, targets2, item_emb, item_bias)
    assert out2.shape == (B2, T2)
    assert jnp.allclose(out2, ref2, atol=1e-5, rtol=1e-5)

    # --- case 3: ragged grid (B=12 with an 8-row tile): no-pad path where the
    #     last block hangs off the end of the batch ---
    B3, T3 = 12, 128
    user_reps3 = jax.random.normal(k_user3, (B3, D, T3), dtype=jnp.float32)
    targets3 = jax.random.randint(k_tgt3, (B3, T3), 0, NUM_ITEMS, dtype=jnp.int32)
    out3 = jax.block_until_ready(
        lstm_net_forward(user_reps3, targets3, item_emb, item_bias, block_batch=8))
    ref3 = _reference(user_reps3, targets3, item_emb, item_bias)
    assert out3.shape == (B3, T3)
    assert jnp.allclose(out3, ref3, atol=1e-5, rtol=1e-5)

    # --- case 4: bf16 HBM-resident inputs (optional bandwidth saver) ---
    u_bf = user_reps2.astype(jnp.bfloat16)
    out4 = jax.block_until_ready(
        lstm_net_forward(u_bf, targets2, item_emb, item_bias, gather_dtype=jnp.bfloat16))
    ref4 = _reference(u_bf.astype(jnp.float32), targets2,
                      item_emb.astype(jnp.bfloat16).astype(jnp.float32), item_bias)
    assert jnp.allclose(out4, ref4, atol=1e-3, rtol=1e-3)

    print("KERNEL_OK")
</pallas_src>

<mosaic_0001>
module attributes {stable_mosaic.version = 11 : i64} {
  func.func @_pred_kernel(%arg0: i32, %arg1: memref<2x32x8xf32, #tpu.memory_space<vmem>>, %arg2: memref<2x32x8xf32, #tpu.memory_space<vmem>>, %arg3: memref<2x8xf32, #tpu.memory_space<vmem>>, %arg4: memref<2x8xf32, #tpu.memory_space<vmem>>) attributes {dimension_semantics = [#tpu.dimension_semantics<parallel>], iteration_bounds = array<i64: 1>, scalar_prefetch = 0 : i64, scratch_operands = 0 : i64, tpu.core_type = #tpu.core_type<tc>, window_params = [{transform_indices = @transform_0, window_bounds = array<i64: 2, 32, 8>}, {transform_indices = @transform_1, window_bounds = array<i64: 2, 32, 8>}, {transform_indices = @transform_2, window_bounds = array<i64: 2, 8>}, {transform_indices = @transform_3, window_bounds = array<i64: 2, 8>}]} {
    %c0 = arith.constant 0 : index
    %c0_0 = arith.constant 0 : index
    %c0_1 = arith.constant 0 : index
    %0 = vector.load %arg1[%c0, %c0_0, %c0_1] : memref<2x32x8xf32, #tpu.memory_space<vmem>>, vector<2x32x8xf32>
    %c0_2 = arith.constant 0 : index
    %c0_3 = arith.constant 0 : index
    %c0_4 = arith.constant 0 : index
    %1 = vector.load %arg2[%c0_2, %c0_3, %c0_4] : memref<2x32x8xf32, #tpu.memory_space<vmem>>, vector<2x32x8xf32>
    %2 = arith.mulf %0, %1 : vector<2x32x8xf32>
    %cst = arith.constant dense<0.000000e+00> : vector<2x8xf32>
    %3 = vector.multi_reduction <add>, %2, %cst [1] : vector<2x32x8xf32> to vector<2x8xf32>
    %c0_5 = arith.constant 0 : index
    %c0_6 = arith.constant 0 : index
    %4 = vector.load %arg3[%c0_5, %c0_6] : memref<2x8xf32, #tpu.memory_space<vmem>>, vector<2x8xf32>
    %5 = arith.addf %3, %4 : vector<2x8xf32>
    %c0_7 = arith.constant 0 : index
    %c0_8 = arith.constant 0 : index
    %6 = vector.load %arg4[%c0_7, %c0_8] : memref<2x8xf32, #tpu.memory_space<vmem>>, vector<2x8xf32>
    tpu.vector_store %arg4[%c0_7, %c0_8], %5 {strides = array<i32>} : memref<2x8xf32, #tpu.memory_space<vmem>>, vector<2x8xf32>,
    return
  }
  func.func @transform_0(%arg0: i32) -> (i32, i32, i32) {
    %c0_i32 = arith.constant 0 : i32
    %c0_i32_0 = arith.constant 0 : i32
    %c0_i32_1 = arith.constant 0 : i32
    return %arg0, %c0_i32, %c0_i32_0 : i32, i32, i32
  }
  func.func @transform_1(%arg0: i32) -> (i32, i32, i32) {
    %c0_i32 = arith.constant 0 : i32
    %c0_i32_0 = arith.constant 0 : i32
    %c0_i32_1 = arith.constant 0 : i32
    return %arg0, %c0_i32, %c0_i32_0 : i32, i32, i32
  }
  func.func @transform_2(%arg0: i32) -> (i32, i32) {
    %c0_i32 = arith.constant 0 : i32
    %c0_i32_0 = arith.constant 0 : i32
    return %arg0, %c0_i32 : i32, i32
  }
  func.func @transform_3(%arg0: i32) -> (i32, i32) {
    %c0_i32 = arith.constant 0 : i32
    %c0_i32_0 = arith.constant 0 : i32
    return %arg0, %c0_i32 : i32, i32
  }
}

</mosaic_0001>

<llo_original>
// kernel: tpu_custom_call.1
$region0: #{tpu_custom_call.1}
  #allocation0 [shape = 'u32[]', space=smem, size = 0x4, offset = 0x4, fixed_abs, tag = 'smem constant byte address 0x4 - core index']
  #allocation1 [shape = 'u32[144,128]{1,0:T(1,128)}', space=vmem, size = 0x12000, scoped, tag = 'internal scratch']
  %s0 = inlined_call_operand.vmem [shape: f32[2,32,8], index: 0, kind: input, shape index: {}]
  %s1 = inlined_call_operand.vmem [shape: f32[2,32,8], index: 1, kind: input, shape index: {}]
  %s2 = inlined_call_operand.vmem [shape: f32[2,8], index: 2, kind: input, shape index: {}]
  %s3 = inlined_call_operand.hbm [shape: f32[2,8], index: 3, kind: output, shape index: {}]
  %s4 = sld [smem:[#allocation0]]
  $region22: #{tpu_custom_call.1} parent=0
    _
  %s6 = ssub.s32 1, %s4
  %s7 = scalar_select 0, %s6, %s4
  $region1: #{tpu_custom_call.1} parent=0
    #allocation2 [shape = 'u8[1024]{0}', space=vmem, size = 0x400, scoped, tag = 'output window, operand 0, single buffered']
    #allocation3 [shape = 's32[1]{0}', space=sflag, size = 0x4, scoped, tag = 'scoped memory for tpu_custom_call.1']
    %8 = vsyncpa [#allocation3], 0
    // Predicated region
    $region2: #{tpu_custom_call.1} parent=1 // pred_check
      _
    $region3: #{tpu_custom_call.1} parent=1 // pred_check_branch
      %10 = sbr.rel (0) target = $region5
    $region4: #{tpu_custom_call.1} parent=1 // pred_region
      _
    $region5: #{tpu_custom_call.1} parent=1 // pred_fallthru
      _
    // Predicated region
    $region6: #{tpu_custom_call.1} parent=1 // pred_check
      _
    $region7: #{tpu_custom_call.1} parent=1 // pred_check_branch
      %12 = sbr.rel (0) target = $region9
    $region8: #{tpu_custom_call.1} parent=1 // pred_region
      _
    $region9: #{tpu_custom_call.1} parent=1 // pred_fallthru
      _
    // Predicated region
    $region10: #{tpu_custom_call.1} parent=1 // pred_check
      _
    $region11: #{tpu_custom_call.1} parent=1 // pred_check_branch
      %14 = sbr.rel (0) target = $region13
    $region12: #{tpu_custom_call.1} parent=1 // pred_region
      _
    $region13: #{tpu_custom_call.1} parent=1 // pred_fallthru
      _
    %v15 = vld [vmem:[%s0] sm:$0xff]
    %v16 = vld [vmem:[%s0 + $0x8] sm:$0xff]
    %v17 = vld [vmem:[%s0 + $0x10] sm:$0xff]
    %v18 = vld [vmem:[%s0 + $0x18] sm:$0xff]
    %v19 = vld [vmem:[%s0 + $0x20] sm:$0xff]
    %v20 = vld [vmem:[%s0 + $0x28] sm:$0xff]
    %v21 = vld [vmem:[%s0 + $0x30] sm:$0xff]
    %v22 = vld [vmem:[%s0 + $0x38] sm:$0xff]
    %v23 = vld [vmem:[%s1] sm:$0xff]
    %v24 = vld [vmem:[%s1 + $0x8] sm:$0xff]
    %v25 = vld [vmem:[%s1 + $0x10] sm:$0xff]
    %v26 = vld [vmem:[%s1 + $0x18] sm:$0xff]
    %v27 = vld [vmem:[%s1 + $0x20] sm:$0xff]
    %v28 = vld [vmem:[%s1 + $0x28] sm:$0xff]
    %v29 = vld [vmem:[%s1 + $0x30] sm:$0xff]
    %v30 = vld [vmem:[%s1 + $0x38] sm:$0xff]
    %v31 = vmul.f32 %v15, %v23
    %v32 = vmul.f32 %v16, %v24
    %v33 = vmul.f32 %v17, %v25
    %v34 = vmul.f32 %v18, %v26
    %v35 = vmul.f32 %v19, %v27
    %v36 = vmul.f32 %v20, %v28
    %v37 = vmul.f32 %v21, %v29
    %v38 = vmul.f32 %v22, %v30
    %vm39 = vcmask 64512
    %v40 = vsel %vm39, %v31, 0.0
    %v41 = vsel %vm39, %v32, 0.0
    %v42 = vadd.f32 %v40, %v41
    %v43 = vsel %vm39, %v33, 0.0
    %v44 = vadd.f32 %v42, %v43
    %v45 = vsel %vm39, %v34, 0.0
    %v46 = vadd.f32 %v44, %v45
    %v47 = vrot.slane %v46, 4
    %v48 = vadd.f32 %v46, %v47
    %v49 = vrot.slane %v48, 2
    %v50 = vadd.f32 %v48, %v49
    %v51 = vrot.slane %v50, 1
    %v52 = vadd.f32 %v50, %v51
    %v53 = vsel %vm39, %v35, 0.0
    %v54 = vsel %vm39, %v36, 0.0
    %v55 = vadd.f32 %v53, %v54
    %v56 = vsel %vm39, %v37, 0.0
    %v57 = vadd.f32 %v55, %v56
    %v58 = vsel %vm39, %v38, 0.0
    %v59 = vadd.f32 %v57, %v58
    %v60 = vrot.slane %v59, 4
    %v61 = vadd.f32 %v59, %v60
    %v62 = vrot.slane %v61, 2
    %v63 = vadd.f32 %v61, %v62
    %v64 = vrot.slane %v63, 1
    %v65 = vadd.f32 %v63, %v64
    %v66 = vld [vmem:[%s2] sm:$0x3]
    %v68 = vrot.slane %v66, 1
    %v71 = vadd.f32 %v52, %v66
    %v72 = vadd.f32 %v65, %v68
    %v75 = vrot.slane %v72, 7
    %vm76 = vcmask 1041409
    %v77 = vsel %vm76, %v75, %v71
    %vm79 = vcmask 58368
    %80 = vst.msk [vmem:[#allocation2] sm:$0x3] %vm79, %v77
    // Predicated region
    $region14: #{tpu_custom_call.1} parent=1 // pred_check
      _
    $region15: #{tpu_custom_call.1} parent=1 // pred_check_branch
      %82 = sbr.rel (0) target = $region17
    $region16: #{tpu_custom_call.1} parent=1 // pred_region
      %s84 = ssub.s32 32, 32
      %85 = vsyncadd [#allocation3], %s84
      %s87 = sshll.u32 [#allocation2], 4
      %s88 = int_to_ptr.vmem [resolvable:$true] %s87
      %90 = dma.vmem_to_hbm [thread:$0]  %s88, 32, %s3, [#allocation3]
    $region17: #{tpu_custom_call.1} parent=1 // pred_fallthru
      _
    // Predicated region
    $region18: #{tpu_custom_call.1} parent=1 // pred_check
      _
    $region19: #{tpu_custom_call.1} parent=1 // pred_check_branch
      %92 = sbr.rel (0) target = $region21
    $region20: #{tpu_custom_call.1} parent=1 // pred_region
      %93 = dma.done [#allocation3], 32
    $region21: #{tpu_custom_call.1} parent=1 // pred_fallthru
      _
    %94 = vsyncpa [#allocation3], 1

</llo_original>
